<compile_context>
chip_gen: v5e
topology: v5e:2x2
jax: 0.10.0
libtpu: 0.0.40
codegen_flags: <defaults>
</compile_context>

<pallas_src>
import functools
import math

import jax
import jax.numpy as jnp
from jax.experimental import pallas as pl
from jax.experimental.pallas import tpu as pltpu

_LANES = 128
_MAX_ROW_TILE = 2048        # rows of 128 lanes: 2 MiB / (C=2, f32) input block
_CHUNK_ROWS = 512           # in-kernel streaming chunk within a block
_STEP_OVERHEAD_ROWS = 256   # ~0.35us/grid-step expressed in rows of HBM traffic


# --------------------------------------------------------------------------
# Main kernel: lane-dense (N, C, R, 128) layout, S = R * 128.
# Grid = (N, n_splits, tiles_per_split); axis 2 is the reduction axis.
# --------------------------------------------------------------------------
def _aftl_rows_kernel(yp_ref, yt_ref, sums_ref, tp_acc, syt_acc, syp_acc, *,
                      epsilon, valid_rows, row_tile, chunk_rows,
                      tiles_per_split, total_tiles, needs_mask):
    p = pl.program_id(1)                 # spatial split (parallel on v7x)
    t = pl.program_id(2)                 # reduction step within the split
    g = p * tiles_per_split + t          # global row-tile index
    n_chunks = row_tile // chunk_rows

    @pl.when(t == 0)
    def _init():
        tp_acc[...] = jnp.zeros_like(tp_acc)
        syt_acc[...] = jnp.zeros_like(syt_acc)
        syp_acc[...] = jnp.zeros_like(syp_acc)

    def _accum(chunk_idx, masked):
        r0 = chunk_idx * chunk_rows
        if not isinstance(r0, int):
            r0 = pl.multiple_of(r0, chunk_rows)
        yp = yp_ref[:, :, pl.ds(r0, chunk_rows), :].astype(jnp.float32)
        yt = yt_ref[:, :, pl.ds(r0, chunk_rows), :].astype(jnp.float32)
        yp = jnp.clip(yp, epsilon, 1.0 - epsilon)
        if masked:
            # Ragged last row-tile: rows >= valid_rows hold unspecified DMA
            # contents (possibly NaN).  Mask BOTH operands via select so
            # neither sum(yp) nor sum(yt) picks up garbage.
            row = jax.lax.broadcasted_iota(jnp.int32, yp.shape, 2)
            valid = (g * row_tile + r0 + row) < valid_rows
            yp = jnp.where(valid, yp, 0.0)
            yt = jnp.where(valid, yt, 0.0)
        # Row-axis partial sums only; cross-lane reduce deferred to finalize.
        tp_acc[...] += jnp.sum(yt * yp, axis=2)     # (1, C, 128)
        syt_acc[...] += jnp.sum(yt, axis=2)
        syp_acc[...] += jnp.sum(yp, axis=2)

    def _sweep(masked):
        if n_chunks == 1:
            _accum(0, masked)
        else:
            def body(c, carry):
                _accum(c, masked)
                return carry
            jax.lax.fori_loop(0, n_chunks, body, 0, unroll=True)

    if needs_mask:
        # Mask only the single ragged tile; every other tile is pure
        # clip + mul + add (keeps the kernel HBM-bound).
        is_last = g == total_tiles - 1

        @pl.when(g != total_tiles - 1)
        def _unmasked():
            _sweep(False)

        @pl.when(is_last)
        def _masked():
            _sweep(True)
    else:
        _sweep(False)

    @pl.when(t == tiles_per_split - 1)
    def _finalize():
        tp = jnp.sum(tp_acc[...], axis=2)           # (1, C) cross-lane reduce
        syt = jnp.sum(syt_acc[...], axis=2)
        syp = jnp.sum(syp_acc[...], axis=2)
        sums = jnp.concatenate([tp, syt, syp], axis=0)   # (3, C)
        sums_ref[...] = sums[None, None]                 # (1, 1, 3, C)


# --------------------------------------------------------------------------
# Fallback kernel for H*W not a multiple of 128: flat (N, C, S) layout.
# --------------------------------------------------------------------------
def _aftl_flat_kernel(yp_ref, yt_ref, sums_ref, tp_acc, syt_acc, syp_acc, *,
                      epsilon, valid_elems, tile_s, needs_mask):
    t = pl.program_id(1)

    @pl.when(t == 0)
    def _init():
        tp_acc[...] = jnp.zeros_like(tp_acc)
        syt_acc[...] = jnp.zeros_like(syt_acc)
        syp_acc[...] = jnp.zeros_like(syp_acc)

    yp = jnp.clip(yp_ref[...].astype(jnp.float32), epsilon, 1.0 - epsilon)
    yt = yt_ref[...].astype(jnp.float32)
    if needs_mask:
        idx = jax.lax.broadcasted_iota(jnp.int32, yp.shape, 2)
        valid = (t * tile_s + idx) < valid_elems
        yp = jnp.where(valid, yp, 0.0)
        yt = jnp.where(valid, yt, 0.0)
    tp_acc[...] += jnp.sum(yt * yp, axis=2)          # (1, C)
    syt_acc[...] += jnp.sum(yt, axis=2)
    syp_acc[...] += jnp.sum(yp, axis=2)

    @pl.when(t == pl.num_programs(1) - 1)
    def _finalize():
        sums = jnp.concatenate([tp_acc[...], syt_acc[...], syp_acc[...]],
                               axis=0)               # (3, C)
        sums_ref[...] = sums[None, None]             # (1, 1, 3, C)


# --------------------------------------------------------------------------
# Tiling plans + pallas_call wrappers.
# --------------------------------------------------------------------------
def _plan_rows(n_rows, max_rows, want_split):
    """Pick (row_tile, n_splits, tiles_per_split, needs_mask).

    Guarantees cdiv(n_rows, row_tile) == n_splits * tiles_per_split, so only
    the last global tile can be ragged (never a fully out-of-bounds tile).
    """
    cands = []
    t = 8
    while t <= max_rows:
        cands.append(t)
        t *= 2
    if n_rows <= max_rows and n_rows not in cands:
        cands.append(n_rows)          # full-dim block: exempt from %8 rule

    def steps(tile):
        return -(-n_rows // tile)

    def cost(tile):                   # padded DMA rows + per-grid-step overhead
        return steps(tile) * tile + _STEP_OVERHEAD_ROWS * steps(tile)

    n_splits = 1
    row_tile = min(cands, key=cost)
    if want_split:
        split_cands = [c for c in cands if steps(c) >= 2 and steps(c) % 2 == 0]
        if split_cands:
            row_tile = min(split_cands, key=cost)
            n_splits = 2
    total = steps(row_tile)
    tiles_per_split = total // n_splits
    needs_mask = (total * row_tile != n_rows)
    return row_tile, n_splits, tiles_per_split, needs_mask


def _run_rows(yp, yt, *, epsilon):
    N, C, S = yp.shape
    R = S // _LANES
    # Keep the double-buffered footprint ~8 MiB whatever C is.
    max_rows = max(8, min(_MAX_ROW_TILE, (_MAX_ROW_TILE * 2) // C))
    want_split = (N % 2 == 1)         # keep v7x's 2nd TensorCore busy (N==1/odd)
    row_tile, n_splits, tiles_per_split, needs_mask = _plan_rows(
        R, max_rows, want_split)
    total_tiles = n_splits * tiles_per_split
    chunk_rows = row_tile
    while chunk_rows > _CHUNK_ROWS and chunk_rows % 2 == 0:
        chunk_rows //= 2

    yp = yp.reshape(N, C, R, _LANES)  # free reshape (no copy)
    yt = yt.reshape(N, C, R, _LANES)

    kernel = functools.partial(
        _aftl_rows_kernel, epsilon=epsilon, valid_rows=R, row_tile=row_tile,
        chunk_rows=chunk_rows, tiles_per_split=tiles_per_split,
        total_tiles=total_tiles, needs_mask=needs_mask)

    in_spec = pl.BlockSpec(
        (1, C, row_tile, _LANES),
        lambda n, p, t: (n, 0, p * tiles_per_split + t, 0))

    return pl.pallas_call(
        kernel,
        out_shape=jax.ShapeDtypeStruct((N, n_splits, 3, C), jnp.float32),
        grid_spec=pltpu.PrefetchScalarGridSpec(
            num_scalar_prefetch=0,
            grid=(N, n_splits, tiles_per_split),
            in_specs=[in_spec, in_spec],
            out_specs=pl.BlockSpec((1, 1, 3, C), lambda n, p, t: (n, p, 0, 0)),
            scratch_shapes=[pltpu.VMEM((1, C, _LANES), jnp.float32)] * 3,
        ),
        compiler_params=pltpu.CompilerParams(
            dimension_semantics=("parallel", "parallel", "arbitrary")),
    )(yp, yt)


def _run_flat(yp, yt, *, epsilon):
    N, C, S = yp.shape
    max_flat = max(_LANES, ((_MAX_ROW_TILE * 2 // C) * _LANES))
    max_flat = (max_flat // _LANES) * _LANES
    if S <= max_flat:
        tile_s, needs_mask = S, False          # full-dim block, no mask needed
    else:
        tile_s, needs_mask = max_flat, (S % max_flat != 0)
    n_tiles = pl.cdiv(S, tile_s)

    kernel = functools.partial(
        _aftl_flat_kernel, epsilon=epsilon, valid_elems=S, tile_s=tile_s,
        needs_mask=needs_mask)

    in_spec = pl.BlockSpec((1, C, tile_s), lambda n, t: (n, 0, t))
    return pl.pallas_call(
        kernel,
        out_shape=jax.ShapeDtypeStruct((N, 1, 3, C), jnp.float32),
        grid_spec=pltpu.PrefetchScalarGridSpec(
            num_scalar_prefetch=0,
            grid=(N, n_tiles),
            in_specs=[in_spec, in_spec],
            out_specs=pl.BlockSpec((1, 1, 3, C), lambda n, t: (n, 0, 0, 0)),
            scratch_shapes=[pltpu.VMEM((1, C), jnp.float32)] * 3,
        ),
        compiler_params=pltpu.CompilerParams(
            dimension_semantics=("parallel", "arbitrary")),
    )(yp, yt)


def asymmetric_focal_tversky_loss(y_pred, y_true, *, delta=0.7, gamma=0.75,
                                  epsilon=1e-7):
    """Matches torch AsymmetricFocalTverskyLoss.forward (NCHW or NCDHW)."""
    assert y_pred.ndim in (4, 5), "shape must be 4D (NCHW) or 5D (NCDHW)"
    assert y_true.shape == y_pred.shape
    N, C = y_pred.shape[:2]
    assert C >= 2, "loss indexes class channels 0 and 1"
    S = math.prod(y_pred.shape[2:])

    yp = y_pred.reshape(N, C, S)   # free reshapes; kernel upcasts, so bf16 /
    yt = y_true.reshape(N, C, S)   # int8 inputs can be fed natively (no copy).

    if S % _LANES == 0:
        sums = _run_rows(yp, yt, epsilon=float(epsilon))
    else:
        sums = _run_flat(yp, yt, epsilon=float(epsilon))

    # Tiny per-image glue on the (N, splits, 3, C) sums (matches torch).
    sums = jnp.sum(sums, axis=1)                   # combine spatial splits
    tp, syt, syp = sums[:, 0], sums[:, 1], sums[:, 2]
    fn = syt - tp                                  # sum(yt*(1-yp))
    fp = syp - tp                                  # sum((1-yt)*yp)
    dice = (tp + epsilon) / (tp + delta * fn + (1.0 - delta) * fp + epsilon)
    back = 1.0 - dice[:, 0]
    fore = (1.0 - dice[:, 1]) * jnp.power(1.0 - dice[:, 1], -gamma)
    return jnp.mean(jnp.stack([back, fore], axis=-1))


# --------------------------------------------------------------------------
# Pure-JAX reference + self-test.
# --------------------------------------------------------------------------
def _reference(y_pred, y_true, delta=0.7, gamma=0.75, epsilon=1e-7):
    yp = jnp.clip(y_pred.astype(jnp.float32), epsilon, 1.0 - epsilon)
    yt = y_true.astype(jnp.float32)
    axis = (2, 3)
    tp = jnp.sum(yt * yp, axis=axis)
    fn = jnp.sum(yt * (1 - yp), axis=axis)
    fp = jnp.sum((1 - yt) * yp, axis=axis)
    dice = (tp + epsilon) / (tp + delta * fn + (1 - delta) * fp + epsilon)
    back = 1 - dice[:, 0]
    fore = (1 - dice[:, 1]) * jnp.power(1 - dice[:, 1], -gamma)
    return jnp.mean(jnp.stack([back, fore], axis=-1))


if __name__ == "__main__":
    def _make_inputs(key, n, c, h, w):
        k1, k2 = jax.random.split(key)
        logits = jax.random.normal(k1, (n, c, h, w), dtype=jnp.float32)
        y_pred = jax.nn.softmax(logits, axis=1)
        labels = jax.random.randint(k2, (n, h, w), 0, c)
        y_true = jax.nn.one_hot(labels, c, axis=1, dtype=jnp.float32)
        return y_pred, y_true

    key = jax.random.PRNGKey(0)
    cases = [
        (2, 2, 16, 16),   # aligned path, one block per image, no masking
        (1, 2, 80, 80),   # aligned path, 2-way spatial split + ragged mask
        (2, 2, 15, 15),   # H*W % 128 != 0 -> flat fallback path
    ]
    for idx, (n, c, h, w) in enumerate(cases):
        key, sub = jax.random.split(key)
        y_pred, y_true = _make_inputs(sub, n, c, h, w)
        loss = jax.block_until_ready(asymmetric_focal_tversky_loss(y_pred, y_true))
        ref = jax.block_until_ready(_reference(y_pred, y_true))
        if not jnp.allclose(loss, ref, rtol=1e-4, atol=1e-6):
            raise AssertionError(
                f"case {idx} {(n, c, h, w)} mismatch: kernel={loss} ref={ref}")
    print("KERNEL_OK")
</pallas_src>

<mosaic_0001>
module attributes {stable_mosaic.version = 11 : i64} {
  func.func @_aftl_rows_kernel(%arg0: i32, %arg1: i32, %arg2: i32, %arg3: memref<1x2x2x128xf32, #tpu.memory_space<vmem>>, %arg4: memref<1x2x2x128xf32, #tpu.memory_space<vmem>>, %arg5: memref<1x1x3x2xf32, #tpu.memory_space<vmem>>, %arg6: memref<1x2x128xf32, #tpu.memory_space<vmem>>, %arg7: memref<1x2x128xf32, #tpu.memory_space<vmem>>, %arg8: memref<1x2x128xf32, #tpu.memory_space<vmem>>) attributes {dimension_semantics = [#tpu.dimension_semantics<parallel>, #tpu.dimension_semantics<parallel>, #tpu.dimension_semantics<arbitrary>], iteration_bounds = array<i64: 2, 1, 1>, scalar_prefetch = 0 : i64, scratch_operands = 3 : i64, tpu.core_type = #tpu.core_type<tc>, window_params = [{transform_indices = @transform_0, window_bounds = array<i64: 1, 2, 2, 128>}, {transform_indices = @transform_1, window_bounds = array<i64: 1, 2, 2, 128>}, {transform_indices = @transform_2, window_bounds = array<i64: 1, 1, 3, 2>}]} {
    %c0_i32 = arith.constant 0 : i32
    %0 = arith.cmpi eq, %arg2, %c0_i32 : i32
    %1 = arith.extui %0 : i1 to i32
    %c0_i32_0 = arith.constant 0 : i32
    %2 = arith.cmpi ne, %1, %c0_i32_0 : i32
    scf.if %2 {
      %cst_32 = arith.constant 0.000000e+00 : f32
      %25 = vector.broadcast %cst_32 : f32 to vector<1x2x128xf32>
      %c0_33 = arith.constant 0 : index
      %c0_34 = arith.constant 0 : index
      %c0_35 = arith.constant 0 : index
      %26 = vector.load %arg6[%c0_33, %c0_34, %c0_35] : memref<1x2x128xf32, #tpu.memory_space<vmem>>, vector<1x2x128xf32>
      tpu.vector_store %arg6[%c0_33, %c0_34, %c0_35], %25 {strides = array<i32>} : memref<1x2x128xf32, #tpu.memory_space<vmem>>, vector<1x2x128xf32>,
      %cst_36 = arith.constant 0.000000e+00 : f32
      %27 = vector.broadcast %cst_36 : f32 to vector<1x2x128xf32>
      %c0_37 = arith.constant 0 : index
      %c0_38 = arith.constant 0 : index
      %c0_39 = arith.constant 0 : index
      %28 = vector.load %arg7[%c0_37, %c0_38, %c0_39] : memref<1x2x128xf32, #tpu.memory_space<vmem>>, vector<1x2x128xf32>
      tpu.vector_store %arg7[%c0_37, %c0_38, %c0_39], %27 {strides = array<i32>} : memref<1x2x128xf32, #tpu.memory_space<vmem>>, vector<1x2x128xf32>,
      %cst_40 = arith.constant 0.000000e+00 : f32
      %29 = vector.broadcast %cst_40 : f32 to vector<1x2x128xf32>
      %c0_41 = arith.constant 0 : index
      %c0_42 = arith.constant 0 : index
      %c0_43 = arith.constant 0 : index
      %30 = vector.load %arg8[%c0_41, %c0_42, %c0_43] : memref<1x2x128xf32, #tpu.memory_space<vmem>>, vector<1x2x128xf32>
      tpu.vector_store %arg8[%c0_41, %c0_42, %c0_43], %29 {strides = array<i32>} : memref<1x2x128xf32, #tpu.memory_space<vmem>>, vector<1x2x128xf32>,
    } else {
    }
    %c0 = arith.constant 0 : index
    %c0_1 = arith.constant 0 : index
    %c0_2 = arith.constant 0 : index
    %c0_3 = arith.constant 0 : index
    %3 = vector.load %arg3[%c0, %c0_1, %c0_2, %c0_3] : memref<1x2x2x128xf32, #tpu.memory_space<vmem>>, vector<1x2x2x128xf32>
    %c0_4 = arith.constant 0 : index
    %c0_5 = arith.constant 0 : index
    %c0_6 = arith.constant 0 : index
    %c0_7 = arith.constant 0 : index
    %4 = vector.load %arg4[%c0_4, %c0_5, %c0_6, %c0_7] : memref<1x2x2x128xf32, #tpu.memory_space<vmem>>, vector<1x2x2x128xf32>
    %cst = arith.constant 1.000000e-07 : f32
    %cst_8 = arith.constant 0.99999988 : f32
    %5 = vector.broadcast %cst : f32 to vector<1x2x2x128xf32>
    %6 = arith.maximumf %5, %3 : vector<1x2x2x128xf32>
    %7 = vector.broadcast %cst_8 : f32 to vector<1x2x2x128xf32>
    %8 = arith.minimumf %7, %6 : vector<1x2x2x128xf32>
    %c0_9 = arith.constant 0 : index
    %c0_10 = arith.constant 0 : index
    %c0_11 = arith.constant 0 : index
    %9 = vector.load %arg6[%c0_9, %c0_10, %c0_11] : memref<1x2x128xf32, #tpu.memory_space<vmem>>, vector<1x2x128xf32>
    %10 = arith.mulf %4, %8 : vector<1x2x2x128xf32>
    %cst_12 = arith.constant dense<0.000000e+00> : vector<1x2x128xf32>
    %11 = vector.multi_reduction <add>, %10, %cst_12 [2] : vector<1x2x2x128xf32> to vector<1x2x128xf32>
    %12 = arith.addf %9, %11 : vector<1x2x128xf32>
    %c0_13 = arith.constant 0 : index
    %c0_14 = arith.constant 0 : index
    %c0_15 = arith.constant 0 : index
    %13 = vector.load %arg6[%c0_13, %c0_14, %c0_15] : memref<1x2x128xf32, #tpu.memory_space<vmem>>, vector<1x2x128xf32>
    tpu.vector_store %arg6[%c0_13, %c0_14, %c0_15], %12 {strides = array<i32>} : memref<1x2x128xf32, #tpu.memory_space<vmem>>, vector<1x2x128xf32>,
    %c0_16 = arith.constant 0 : index
    %c0_17 = arith.constant 0 : index
    %c0_18 = arith.constant 0 : index
    %14 = vector.load %arg7[%c0_16, %c0_17, %c0_18] : memref<1x2x128xf32, #tpu.memory_space<vmem>>, vector<1x2x128xf32>
    %cst_19 = arith.constant dense<0.000000e+00> : vector<1x2x128xf32>
    %15 = vector.multi_reduction <add>, %4, %cst_19 [2] : vector<1x2x2x128xf32> to vector<1x2x128xf32>
    %16 = arith.addf %14, %15 : vector<1x2x128xf32>
    %c0_20 = arith.constant 0 : index
    %c0_21 = arith.constant 0 : index
    %c0_22 = arith.constant 0 : index
    %17 = vector.load %arg7[%c0_20, %c0_21, %c0_22] : memref<1x2x128xf32, #tpu.memory_space<vmem>>, vector<1x2x128xf32>
    tpu.vector_store %arg7[%c0_20, %c0_21, %c0_22], %16 {strides = array<i32>} : memref<1x2x128xf32, #tpu.memory_space<vmem>>, vector<1x2x128xf32>,
    %c0_23 = arith.constant 0 : index
    %c0_24 = arith.constant 0 : index
    %c0_25 = arith.constant 0 : index
    %18 = vector.load %arg8[%c0_23, %c0_24, %c0_25] : memref<1x2x128xf32, #tpu.memory_space<vmem>>, vector<1x2x128xf32>
    %cst_26 = arith.constant dense<0.000000e+00> : vector<1x2x128xf32>
    %19 = vector.multi_reduction <add>, %8, %cst_26 [2] : vector<1x2x2x128xf32> to vector<1x2x128xf32>
    %20 = arith.addf %18, %19 : vector<1x2x128xf32>
    %c0_27 = arith.constant 0 : index
    %c0_28 = arith.constant 0 : index
    %c0_29 = arith.constant 0 : index
    %21 = vector.load %arg8[%c0_27, %c0_28, %c0_29] : memref<1x2x128xf32, #tpu.memory_space<vmem>>, vector<1x2x128xf32>
    tpu.vector_store %arg8[%c0_27, %c0_28, %c0_29], %20 {strides = array<i32>} : memref<1x2x128xf32, #tpu.memory_space<vmem>>, vector<1x2x128xf32>,
    %c0_i32_30 = arith.constant 0 : i32
    %22 = arith.cmpi eq, %arg2, %c0_i32_30 : i32
    %23 = arith.extui %22 : i1 to i32
    %c0_i32_31 = arith.constant 0 : i32
    %24 = arith.cmpi ne, %23, %c0_i32_31 : i32
    scf.if %24 {
      %c0_32 = arith.constant 0 : index
      %c0_33 = arith.constant 0 : index
      %c0_34 = arith.constant 0 : index
      %25 = vector.load %arg6[%c0_32, %c0_33, %c0_34] : memref<1x2x128xf32, #tpu.memory_space<vmem>>, vector<1x2x128xf32>
      %cst_35 = arith.constant dense<0.000000e+00> : vector<1x2xf32>
      %26 = vector.multi_reduction <add>, %25, %cst_35 [2] : vector<1x2x128xf32> to vector<1x2xf32>
      %c0_36 = arith.constant 0 : index
      %c0_37 = arith.constant 0 : index
      %c0_38 = arith.constant 0 : index
      %27 = vector.load %arg7[%c0_36, %c0_37, %c0_38] : memref<1x2x128xf32, #tpu.memory_space<vmem>>, vector<1x2x128xf32>
      %cst_39 = arith.constant dense<0.000000e+00> : vector<1x2xf32>
      %28 = vector.multi_reduction <add>, %27, %cst_39 [2] : vector<1x2x128xf32> to vector<1x2xf32>
      %c0_40 = arith.constant 0 : index
      %c0_41 = arith.constant 0 : index
      %c0_42 = arith.constant 0 : index
      %29 = vector.load %arg8[%c0_40, %c0_41, %c0_42] : memref<1x2x128xf32, #tpu.memory_space<vmem>>, vector<1x2x128xf32>
      %cst_43 = arith.constant dense<0.000000e+00> : vector<1x2xf32>
      %30 = vector.multi_reduction <add>, %29, %cst_43 [2] : vector<1x2x128xf32> to vector<1x2xf32>
      %31 = tpu.concatenate %26, %28, %30 in 0 : vector<1x2xf32>, vector<1x2xf32>, vector<1x2xf32> -> vector<3x2xf32>
      %32 = vector.shape_cast %31 : vector<3x2xf32> to vector<1x1x3x2xf32>
      %c0_44 = arith.constant 0 : index
      %c0_45 = arith.constant 0 : index
      %c0_46 = arith.constant 0 : index
      %c0_47 = arith.constant 0 : index
      %33 = vector.load %arg5[%c0_44, %c0_45, %c0_46, %c0_47] : memref<1x1x3x2xf32, #tpu.memory_space<vmem>>, vector<1x1x3x2xf32>
      tpu.vector_store %arg5[%c0_44, %c0_45, %c0_46, %c0_47], %32 {strides = array<i32>} : memref<1x1x3x2xf32, #tpu.memory_space<vmem>>, vector<1x1x3x2xf32>,
    } else {
    }
    return
  }
  func.func @transform_0(%arg0: i32, %arg1: i32, %arg2: i32) -> (i32, i32, i32, i32) {
    %c1_i32 = arith.constant 1 : i32
    %0 = arith.muli %arg1, %c1_i32 : i32
    %1 = arith.addi %0, %arg2 : i32
    %c0_i32 = arith.constant 0 : i32
    %c0_i32_0 = arith.constant 0 : i32
    %c0_i32_1 = arith.constant 0 : i32
    return %arg0, %c0_i32, %1, %c0_i32_0 : i32, i32, i32, i32
  }
  func.func @transform_1(%arg0: i32, %arg1: i32, %arg2: i32) -> (i32, i32, i32, i32) {
    %c1_i32 = arith.constant 1 : i32
    %0 = arith.muli %arg1, %c1_i32 : i32
    %1 = arith.addi %0, %arg2 : i32
    %c0_i32 = arith.constant 0 : i32
    %c0_i32_0 = arith.constant 0 : i32
    %c0_i32_1 = arith.constant 0 : i32
    return %arg0, %c0_i32, %1, %c0_i32_0 : i32, i32, i32, i32
  }
  func.func @transform_2(%arg0: i32, %arg1: i32, %arg2: i32) -> (i32, i32, i32, i32) {
    %c0_i32 = arith.constant 0 : i32
    %c0_i32_0 = arith.constant 0 : i32
    %c0_i32_1 = arith.constant 0 : i32
    return %arg0, %arg1, %c0_i32, %c0_i32_0 : i32, i32, i32, i32
  }
}

</mosaic_0001>

<llo_original>
// kernel: tpu_custom_call.1
$region0: #{tpu_custom_call.1}
  #allocation0 [shape = 'u32[]', space=smem, size = 0x4, offset = 0x4, fixed_abs, tag = 'smem constant byte address 0x4 - core index']
  #allocation1 [shape = 'u32[72,128]{1,0:T(1,128)}', space=vmem, size = 0x9000, scoped, tag = 'internal scratch']
  #allocation2 [shape = 'f32[1,2,128]{2,1,0:T(2,128)}', space=vmem, size = 0x400, scoped, tag = 'scratch operand']
  #allocation3 [shape = 'f32[1,2,128]{2,1,0:T(2,128)}', space=vmem, size = 0x400, scoped, tag = 'scratch operand']
  #allocation4 [shape = 'f32[1,2,128]{2,1,0:T(2,128)}', space=vmem, size = 0x400, scoped, tag = 'scratch operand']
  %s0 = inlined_call_operand.hbm [shape: f32[2,2,2,128], index: 0, kind: input, shape index: {}]
  %s1 = inlined_call_operand.hbm [shape: f32[2,2,2,128], index: 1, kind: input, shape index: {}]
  %s2 = inlined_call_operand.vmem [shape: f32[2,1,3,2], index: 2, kind: output, shape index: {}]
  %s3 = sld [smem:[#allocation0]]
  $region57: #{tpu_custom_call.1} parent=0
    _
  %s5 = ssub.s32 1, %s3
  %s6 = scalar_select 0, %s5, %s3
  $region1: #{tpu_custom_call.1} parent=0
    #allocation5 [shape = 'u8[4096]{0}', space=vmem, size = 0x1000, scoped, tag = 'input window, operand 0']
    #allocation6 [shape = 's32[2]{0}', space=sflag, size = 0x8, scoped, tag = 'scoped memory for tpu_custom_call.1']
    #allocation7 [shape = 'u8[4096]{0}', space=vmem, size = 0x1000, scoped, tag = 'input window, operand 1']
    #allocation8 [shape = 's32[2]{0}', space=sflag, size = 0x8, scoped, tag = 'scoped memory for tpu_custom_call.1']
    %7 = vsyncpa [#allocation6], 0
    %s8 = scalar_lea.sflag [#allocation6], 1
    %9 = vsyncpa %s8, 0
    %10 = vsyncpa [#allocation8], 0
    %s11 = scalar_lea.sflag [#allocation8], 1
    %12 = vsyncpa %s11, 0
    loop: start=0, step=1, limit=4
    $region2: #{tpu_custom_call.1} parent=1 // loop_pre_header
      _
    $region3: #{tpu_custom_call.1} parent=1 // loop_header
      %s14 = sphi 0, %s18
      %p15 = scmp.ge.s32.totalorder %s14, 4
      %s21 = sphi 0, %s40
      %s22 = sphi 0, %s36
      %s23 = sphi 0, %s32
      %s24 = sphi 0, %s21
      %s25 = sphi 0, %s22
      %s26 = sphi 0, %s23
      %s27 = sphi 0, %s24
      %s28 = sphi 0, %s25
      %s29 = sphi 0, %s26
      %s47 = sphi 0, %s49
      %s50 = sphi 0, %s47
      %s51 = sphi 0, %s50
      %s67 = sphi 0, %s51
      %s77 = sphi 0, %s79
      %s80 = sphi 0, %s77
      %s81 = sphi 0, %s80
      %s97 = sphi 0, %s81
      %s105 = sphi 0, %s107
      %s108 = sphi 0, %s105
      %s109 = sphi 0, %s108
      %s125 = sphi 0, %s109
    $region4: #{tpu_custom_call.1} parent=1 // loop_header_branch
      %17 = sbr.rel (%p15) target = $region8
    $region5: #{tpu_custom_call.1} parent=1 // loop_body
      %s19 = ssub.s32 %s14, 1
      %s20 = ssub.s32 %s14, 2
      %s30 = sadd.s32 1, %s23
      %p31 = scmp.ge.s32.totalorder %s30, 1
      %s32 = scalar_select %p31, 0, %s30
      %s33 = sadd.s32 1, %s22
      %s34 = scalar_select %p31, %s33, %s22
      %p35 = scmp.ge.s32.totalorder %s34, 1
      %s36 = scalar_select %p35, 0, %s34
      %s37 = sadd.s32 1, %s21
      %s38 = scalar_select %p35, %s37, %s21
      %p39 = scmp.ge.s32.totalorder %s38, 2
      %s40 = scalar_select %p39, 0, %s38
      %s41 = sadd.s32 %s22, %s23
      %s42 = sadd.s32 %s36, %s32
      %s43 = ssub.s32 %s21, %s40
      %s44 = ssub.s32 %s41, %s42
      %s45 = sor.u32 %s43, %s44
      %p46 = scmp.eq.s32.totalorder %s45, 0
      %s48 = sadd.s32 %s47, 1
      %s49 = scalar_select %p46, %s47, %s48
      %p52 = pneg %p46
      %p53 = scmp.eq.s32.totalorder %s14, 1
      %p54 = por %p52, %p53
      %p55 = scmp.ne.s32.totalorder %s47, %s50
      %p56 = scmp.eq.s32.totalorder %s14, 0
      %p57 = por %p55, %p56
      %p58 = scmp.ne.s32.totalorder %s47, %s50
      %p59 = scmp.eq.s32.totalorder %s19, 1
      %p60 = por %p58, %p59
      %p61 = scmp.ne.s32.totalorder %s50, %s51
      %p62 = scmp.eq.s32.totalorder %s19, 0
      %p63 = por %p61, %p62
      %p64 = scmp.ne.s32.totalorder %s50, %s51
      %p65 = scmp.eq.s32.totalorder %s20, 1
      %p66 = por %p64, %p65
      %p68 = scmp.ne.s32.totalorder %s51, %s67
      %p69 = scmp.eq.s32.totalorder %s20, 0
      %p70 = por %p68, %p69
      %s71 = sadd.s32 %s22, %s23
      %s72 = sadd.s32 %s36, %s32
      %s73 = ssub.s32 %s21, %s40
      %s74 = ssub.s32 %s71, %s72
      %s75 = sor.u32 %s73, %s74
      %p76 = scmp.eq.s32.totalorder %s75, 0
      %s78 = sadd.s32 %s77, 1
      %s79 = scalar_select %p76, %s77, %s78
      %p82 = pneg %p76
      %p83 = scmp.eq.s32.totalorder %s14, 1
      %p84 = por %p82, %p83
      %p85 = scmp.ne.s32.totalorder %s77, %s80
      %p86 = scmp.eq.s32.totalorder %s14, 0
      %p87 = por %p85, %p86
      %p88 = scmp.ne.s32.totalorder %s77, %s80
      %p89 = scmp.eq.s32.totalorder %s19, 1
      %p90 = por %p88, %p89
      %p91 = scmp.ne.s32.totalorder %s80, %s81
      %p92 = scmp.eq.s32.totalorder %s19, 0
      %p93 = por %p91, %p92
      %p94 = scmp.ne.s32.totalorder %s80, %s81
      %p95 = scmp.eq.s32.totalorder %s20, 1
      %p96 = por %p94, %p95
      %p98 = scmp.ne.s32.totalorder %s81, %s97
      %p99 = scmp.eq.s32.totalorder %s20, 0
      %p100 = por %p98, %p99
      %s101 = ssub.s32 %s21, %s40
      %s102 = ssub.s32 %s22, %s36
      %s103 = sor.u32 %s101, %s102
      %p104 = scmp.eq.s32.totalorder %s103, 0
      %s106 = sadd.s32 %s105, 1
      %s107 = scalar_select %p104, %s105, %s106
      %p110 = pneg %p104
      %p111 = scmp.eq.s32.totalorder %s14, 1
      %p112 = por %p110, %p111
      %p113 = scmp.ne.s32.totalorder %s105, %s108
      %p114 = scmp.eq.s32.totalorder %s14, 0
      %p115 = por %p113, %p114
      %p116 = scmp.ne.s32.totalorder %s105, %s108
      %p117 = scmp.eq.s32.totalorder %s19, 1
      %p118 = por %p116, %p117
      %p119 = scmp.ne.s32.totalorder %s108, %s109
      %p120 = scmp.eq.s32.totalorder %s19, 0
      %p121 = por %p119, %p120
      %p122 = scmp.ne.s32.totalorder %s108, %s109
      %p123 = scmp.eq.s32.totalorder %s20, 1
      %p124 = por %p122, %p123
      %p126 = scmp.ne.s32.totalorder %s109, %s125
      %p127 = scmp.eq.s32.totalorder %s20, 0
      %p128 = por %p126, %p127
      %p129 = scmp.le.s32.totalorder 1, %s14
      %p130 = scmp.lt.s32.totalorder %s14, 3
      %p131 = pnand %p129, %p130
      %p132 = pneg %p131
      // Predicated region
      $region9: #{tpu_custom_call.1} parent=5 // pred_check
        _
      $region10: #{tpu_custom_call.1} parent=5 // pred_check_branch
        %134 = sbr.rel (%p131) target = $region12
      $region11: #{tpu_custom_call.1} parent=5 // pred_region
        %s135 = ssub.s32 %s14, 1
      $region12: #{tpu_custom_call.1} parent=5 // pred_fallthru
        _
      %p136 = scmp.lt.s32.totalorder %s14, 2
      // Predicated region
      $region13: #{tpu_custom_call.1} parent=5 // pred_check
        %p137 = pneg %p136
      $region14: #{tpu_custom_call.1} parent=5 // pred_check_branch
        %139 = sbr.rel (%p137) target = $region16
      $region15: #{tpu_custom_call.1} parent=5 // pred_region
        // Predicated region
        $region17: #{tpu_custom_call.1} parent=15 // pred_check
          %p140 = pneg %p57
        $region18: #{tpu_custom_call.1} parent=15 // pred_check_branch
          %142 = sbr.rel (%p140) target = $region20
        $region19: #{tpu_custom_call.1} parent=15 // pred_region
          %s143 = sand.u32 %s47, 1
          %s144 = scalar_lea.sflag [#allocation6], %s143
          %s145 = sand.u32 %s47, 1
          %s146 = smul.addr %s145, 4
          %s147 = scalar_lea.vmem [#allocation5], %s146
          %s148 = sadd.s32 %s22, %s23
          %150 = vsyncadd %s144, 0
          %s151 = smul.addr %s21, 2
          %s152 = sadd.s32 %s148, %s151
          %s153 = smul.addr %s152, 2
          %s154 = scalar_lea.hbm %s0, %s153
          %s155 = sshll.u32 %s154, 4
          %s156 = int_to_ptr.hbm [resolvable:$true] %s155
          %s157 = sshll.u32 %s147, 4
          %s158 = int_to_ptr.vmem [resolvable:$true] %s157
          %163 = dma.hbm_to_vmem [thread:$0]  %s156, 64, %s158, %s144, 32, 32, 2
        $region20: #{tpu_custom_call.1} parent=15 // pred_fallthru
          _
        // Predicated region
        $region21: #{tpu_custom_call.1} parent=15 // pred_check
          %p164 = pneg %p87
        $region22: #{tpu_custom_call.1} parent=15 // pred_check_branch
          %166 = sbr.rel (%p164) target = $region24
        $region23: #{tpu_custom_call.1} parent=15 // pred_region
          %s167 = sand.u32 %s77, 1
          %s168 = scalar_lea.sflag [#allocation8], %s167
          %s169 = sand.u32 %s77, 1
          %s170 = smul.addr %s169, 4
          %s171 = scalar_lea.vmem [#allocation7], %s170
          %s172 = sadd.s32 %s22, %s23
          %174 = vsyncadd %s168, 0
          %s175 = smul.addr %s21, 2
          %s176 = sadd.s32 %s172, %s175
          %s177 = smul.addr %s176, 2
          %s178 = scalar_lea.hbm %s1, %s177
          %s179 = sshll.u32 %s178, 4
          %s180 = int_to_ptr.hbm [resolvable:$true] %s179
          %s181 = sshll.u32 %s171, 4
          %s182 = int_to_ptr.vmem [resolvable:$true] %s181
          %187 = dma.hbm_to_vmem [thread:$0]  %s180, 64, %s182, %s168, 32, 32, 2
        $region24: #{tpu_custom_call.1} parent=15 // pred_fallthru
          _
      $region16: #{tpu_custom_call.1} parent=5 // pred_fallthru
        _
      %p188 = scmp.le.s32.totalorder 1, %s14
      %p189 = scmp.lt.s32.totalorder %s14, 3
      %p190 = pnand %p188, %p189
      %p191 = pneg %p190
      // Predicated region
      $region25: #{tpu_custom_call.1} parent=5 // pred_check
        _
      $region26: #{tpu_custom_call.1} parent=5 // pred_check_branch
        %193 = sbr.rel (%p190) target = $region28
      $region27: #{tpu_custom_call.1} parent=5 // pred_region
        %s194 = ssub.s32 %s14, 1
        %s195 = sand.u32 %s50, 1
        %s196 = scalar_lea.sflag [#allocation6], %s195
        %s197 = sand.u32 %s50, 1
        %s198 = smul.addr %s197, 4
        %s199 = scalar_lea.vmem [#allocation5], %s198
        // Predicated region
        $region29: #{tpu_custom_call.1} parent=27 // pred_check
          %p200 = pneg %p63
        $region30: #{tpu_custom_call.1} parent=27 // pred_check_branch
          %202 = sbr.rel (%p200) target = $region32
        $region31: #{tpu_custom_call.1} parent=27 // pred_region
          %204 = dma.done %s196, 64
        $region32: #{tpu_custom_call.1} parent=27 // pred_fallthru
          _
        %s205 = sand.u32 %s80, 1
        %s206 = scalar_lea.sflag [#allocation8], %s205
        %s207 = sand.u32 %s80, 1
        %s208 = smul.addr %s207, 4
        %s209 = scalar_lea.vmem [#allocation7], %s208
        // Predicated region
        $region33: #{tpu_custom_call.1} parent=27 // pred_check
          %p210 = pneg %p93
        $region34: #{tpu_custom_call.1} parent=27 // pred_check_branch
          %212 = sbr.rel (%p210) target = $region36
        $region35: #{tpu_custom_call.1} parent=27 // pred_region
          %214 = dma.done %s206, 64
        $region36: #{tpu_custom_call.1} parent=27 // pred_fallthru
          _
        %s215 = sand.u32 %s50, 1
        %s216 = scalar_lea.sflag [#allocation6], %s215
        %s217 = sand.u32 %s50, 1
        %s218 = smul.addr %s217, 4
        %s219 = scalar_lea.vmem [#allocation5], %s218
        %p220 = pneg %p63
        %p221 = pneg %p60
        %s222 = sand.u32 %s80, 1
        %s223 = scalar_lea.sflag [#allocation8], %s222
        %s224 = sand.u32 %s80, 1
        %s225 = smul.addr %s224, 4
        %s226 = scalar_lea.vmem [#allocation7], %s225
        %p227 = pneg %p93
        %p228 = pneg %p90
        %p229 = pneg %p121
        %p230 = pneg %p118
        %p231 = scmp.lt.s32.totalorder %s24, 1
        %s232 = scalar_select %p231, %s24, 1
        %p233 = scmp.lt.s32.totalorder %s25, 0
        %s234 = scalar_select %p233, %s25, 0
        %s235 = sadd.s32 %s234, %s232
        %s236 = smul.addr %s235, 4
        %s237 = scalar_lea.vmem %s2, %s236
        %s238 = sadd.s32 %s25, %s26
        %s239 = sadd.s32 %s25, %s26
        %p240 = scmp.lt.s32.totalorder %s24, 1
        %s241 = scalar_select %p240, %s24, 1
        %p242 = scmp.lt.s32.totalorder %s25, 0
        %s243 = scalar_select %p242, %s25, 0
        %s244 = sadd.s32 %s243, %s241
        %s245 = smul.addr %s244, 4
        %s246 = scalar_lea.vmem %s2, %s245
        %p247 = scmp.eq.s32.totalorder %s26, 0
        // Predicated region
        $region37: #{tpu_custom_call.1} parent=27 // pred_check
          %p248 = pneg %p247
        $region38: #{tpu_custom_call.1} parent=27 // pred_check_branch
          %250 = sbr.rel (%p248) target = $region40
        $region39: #{tpu_custom_call.1} parent=27 // pred_region
          %251 = vst [vmem:[#allocation2] sm:$0x3] 0.0
          %252 = vst [vmem:[#allocation3] sm:$0x3] 0.0
          %253 = vst [vmem:[#allocation4] sm:$0x3] 0.0
        $region40: #{tpu_custom_call.1} parent=27 // pred_fallthru
          _
        %v254 = vld [vmem:[%s199] sm:$0x3]
        %v255 = vld [vmem:[%s199 + $0x2] sm:$0x3]
        %v256 = vld [vmem:[%s209] sm:$0x3]
        %v257 = vld [vmem:[%s209 + $0x2] sm:$0x3]
        %v258 = vmax.f32 %v254, 1e-07
        %v259 = vmax.f32 %v255, 1e-07
        %v260 = vmin.f32 %v258, 0.9999999
        %v261 = vmin.f32 %v259, 0.9999999
        %v262 = vld [vmem:[#allocation2] sm:$0x3]
        %v263 = vmul.f32 %v256, %v260
        %v264 = vmul.f32 %v257, %v261
        %vm265 = vcmask 1041408
        %v266 = vsel %vm265, %v263, 0.0
        %v267 = vrot.slane %v266, 4
        %v268 = vadd.f32 %v266, %v267
        %v269 = vrot.slane %v268, 2
        %v270 = vadd.f32 %v268, %v269
        %v271 = vrot.slane %v270, 1
        %v272 = vadd.f32 %v270, %v271
        %v273 = vsel %vm265, %v264, 0.0
        %v274 = vrot.slane %v273, 4
        %v275 = vadd.f32 %v273, %v274
        %v276 = vrot.slane %v275, 2
        %v277 = vadd.f32 %v275, %v276
        %v278 = vrot.slane %v277, 1
        %v279 = vadd.f32 %v277, %v278
        %vm282 = vcmask 1041409
        %v283 = vsel %vm282, %v279, %v272
        %v285 = vadd.f32 %v262, %v283
        %286 = vst [vmem:[#allocation2] sm:$0x3] %v285
        %v287 = vld [vmem:[#allocation3] sm:$0x3]
        %v288 = vsel %vm265, %v256, 0.0
        %v289 = vrot.slane %v288, 4
        %v290 = vadd.f32 %v288, %v289
        %v291 = vrot.slane %v290, 2
        %v292 = vadd.f32 %v290, %v291
        %v293 = vrot.slane %v292, 1
        %v294 = vadd.f32 %v292, %v293
        %v295 = vsel %vm265, %v257, 0.0
        %v296 = vrot.slane %v295, 4
        %v297 = vadd.f32 %v295, %v296
        %v298 = vrot.slane %v297, 2
        %v299 = vadd.f32 %v297, %v298
        %v300 = vrot.slane %v299, 1
        %v301 = vadd.f32 %v299, %v300
        %v304 = vsel %vm282, %v301, %v294
        %v306 = vadd.f32 %v287, %v304
        %307 = vst [vmem:[#allocation3] sm:$0x3] %v306
        %v308 = vld [vmem:[#allocation4] sm:$0x3]
        %v309 = vsel %vm265, %v260, 0.0
        %v310 = vrot.slane %v309, 4
        %v311 = vadd.f32 %v309, %v310
        %v312 = vrot.slane %v311, 2
        %v313 = vadd.f32 %v311, %v312
        %v314 = vrot.slane %v313, 1
        %v315 = vadd.f32 %v313, %v314
        %v316 = vsel %vm265, %v261, 0.0
        %v317 = vrot.slane %v316, 4
        %v318 = vadd.f32 %v316, %v317
        %v319 = vrot.slane %v318, 2
        %v320 = vadd.f32 %v318, %v319
        %v321 = vrot.slane %v320, 1
        %v322 = vadd.f32 %v320, %v321
        %v325 = vsel %vm282, %v322, %v315
        %v327 = vadd.f32 %v308, %v325
        %328 = vst [vmem:[#allocation4] sm:$0x3] %v327
        // Predicated region
        $region41: #{tpu_custom_call.1} parent=27 // pred_check
          %p329 = pneg %p247
        $region42: #{tpu_custom_call.1} parent=27 // pred_check_branch
          %331 = sbr.rel (%p329) target = $region44
        $region43: #{tpu_custom_call.1} parent=27 // pred_region
          %v332 = vld [vmem:[#allocation2] sm:$0x3]
          %v333 = vsel %vm265, %v332, 0.0
          %334 = vadd.xlane.f32.xlu0 %v333
          %v335 = vpop.xlane.xlu0 %334
          %v336 = vld [vmem:[#allocation3] sm:$0x3]
          %v337 = vsel %vm265, %v336, 0.0
          %338 = vadd.xlane.f32.xlu0 %v337
          %v339 = vpop.xlane.xlu0 %338
          %v340 = vld [vmem:[#allocation4] sm:$0x3]
          %v341 = vsel %vm265, %v340, 0.0
          %342 = vadd.xlane.f32.xlu0 %v341
          %v343 = vpop.xlane.xlu0 %342
          %v345 = vlaneseq
          %v346 = vand.u32 %v345, 127
          %v347 = vperm.slane %v335, %v346
          %v350 = vperm.slane %v339, %v346
          %v353 = vperm.slane %v343, %v346
          %vm355 = vcmask 1040384
          %v356 = vsel %vm355, %v347, %v350
          %v357 = vsel %vm265, %v356, %v353
          %vm358 = vcmask 10240
          %359 = vst.msk [vmem:[%s246] sm:$0x7] %vm358, %v357
        $region44: #{tpu_custom_call.1} parent=27 // pred_fallthru
          _
        %p360 = scmp.lt.s32.totalorder %s24, 1
        %s361 = scalar_select %p360, %s24, 1
        %p362 = scmp.lt.s32.totalorder %s25, 0
        %s363 = scalar_select %p362, %s25, 0
        %s364 = sadd.s32 %s363, %s361
        %s365 = smul.addr %s364, 4
        %s366 = scalar_lea.vmem %s2, %s365
        // Predicated region
        $region45: #{tpu_custom_call.1} parent=27 // pred_check
          %p367 = pneg %p118
        $region46: #{tpu_custom_call.1} parent=27 // pred_check_branch
          %369 = sbr.rel (%p367) target = $region48
        $region47: #{tpu_custom_call.1} parent=27 // pred_region
          _
        $region48: #{tpu_custom_call.1} parent=27 // pred_fallthru
          _
      $region28: #{tpu_custom_call.1} parent=5 // pred_fallthru
        _
      %p370 = scmp.le.s32.totalorder 2, %s14
      // Predicated region
      $region49: #{tpu_custom_call.1} parent=5 // pred_check
        %p371 = pneg %p370
      $region50: #{tpu_custom_call.1} parent=5 // pred_check_branch
        %373 = sbr.rel (%p371) target = $region52
      $region51: #{tpu_custom_call.1} parent=5 // pred_region
        %s374 = ssub.s32 %s14, 2
        // Predicated region
        $region53: #{tpu_custom_call.1} parent=51 // pred_check
          %p375 = pneg %p124
        $region54: #{tpu_custom_call.1} parent=51 // pred_check_branch
          %377 = sbr.rel (%p375) target = $region56
        $region55: #{tpu_custom_call.1} parent=51 // pred_region
          %p378 = scmp.lt.s32.totalorder %s27, 1
          %s379 = scalar_select %p378, %s27, 1
          %p380 = scmp.lt.s32.totalorder %s28, 0
          %s381 = scalar_select %p380, %s28, 0
          %s382 = sadd.s32 %s381, %s379
          %s383 = smul.addr %s382, 4
          %s384 = scalar_lea.vmem %s2, %s383
        $region56: #{tpu_custom_call.1} parent=51 // pred_fallthru
          _
      $region52: #{tpu_custom_call.1} parent=5 // pred_fallthru
        _
    $region6: #{tpu_custom_call.1} parent=1 // loop_footer
      %s18 = sadd.s32 1, %s14
    $region7: #{tpu_custom_call.1} parent=1 // loop_footer_branch
      %13 = sbr.rel target = $region3
    $region8: #{tpu_custom_call.1} parent=1 // loop_exit
      _
    %385 = vsyncpa [#allocation6], 1
    %s386 = scalar_lea.sflag [#allocation6], 1
    %387 = vsyncpa %s386, 1
    %388 = vsyncpa [#allocation8], 1
    %s389 = scalar_lea.sflag [#allocation8], 1
    %390 = vsyncpa %s389, 1

</llo_original>
